<compile_context>
chip_gen: v7x
topology: tpu7x:2x2x1
jax: 0.10.0
libtpu: 0.0.40
codegen_flags: <defaults>
</compile_context>

<pallas_src>
import jax
import jax.numpy as jnp
from jax import lax
from jax.experimental import pallas as pl
from jax.experimental.pallas import tpu as pltpu

BN_EPS = 1e-5
LANE = 128
SUBLANE = 8


def _round_up(n, m):
    return ((n + m - 1) // m) * m


def _padded_sizes(sizes):
    return [max(LANE, _round_up(s, LANE)) for s in sizes]


# --------------------------------------------------------------------------- #
# One-time parameter packing (hoisted out of the per-call path).
# --------------------------------------------------------------------------- #
def pack_params(params_flat, sizes, dot_dtype=jnp.float32):
    """Pack params ONCE at init time.

    params_flat layout (as produced by init_params, weights already (in, out)):
      hidden layer: [W, b, gamma, beta], last layer: [W, b].

    Returns:
      w_list  : tuple of n_layers lane-padded (in_pad, out_pad) weights in dot_dtype
      vec_all : (rows_pad, max_out_pad) f32 row-matrix:
                  hidden li : row 2*li = gamma, row 2*li+1 = beta
                  last      : row 2*(n_layers-1) = bias
    """
    n_layers = len(sizes) - 1
    padded = _padded_sizes(sizes)
    max_out = max(padded[1:])

    w_list = []
    vec_rows = []
    idx = 0
    for li in range(n_layers):
        is_last = li == n_layers - 1
        w, b = params_flat[idx], params_flat[idx + 1]
        idx += 2
        in_p, out_p = padded[li], padded[li + 1]
        w_list.append(jnp.pad(w.astype(dot_dtype),
                              ((0, in_p - w.shape[0]), (0, out_p - w.shape[1]))))
        if not is_last:
            gamma, beta = params_flat[idx], params_flat[idx + 1]
            idx += 2
            vec_rows.append(jnp.pad(gamma[0].astype(jnp.float32),
                                    (0, max_out - gamma.shape[1])))
            vec_rows.append(jnp.pad(beta[0].astype(jnp.float32),
                                    (0, max_out - beta.shape[1])))
            # hidden-layer Linear bias intentionally dropped (cancelled by BN mean).
        else:
            vec_rows.append(jnp.pad(b[0].astype(jnp.float32),
                                    (0, max_out - b.shape[1])))
    n_vec = len(vec_rows)
    rows_pad = _round_up(n_vec, SUBLANE)
    vec_rows += [jnp.zeros((max_out,), jnp.float32)] * (rows_pad - n_vec)
    vec_all = jnp.stack(vec_rows)
    return tuple(w_list), vec_all


# --------------------------------------------------------------------------- #
# Kernel
# --------------------------------------------------------------------------- #
def _make_mlp_kernel(n_layers, padded, batch, b_pad, last_layer_act):
    """Kernel over refs: (x_pad, W_0..W_{L-1}, vec_all) -> out_pad, scratch h."""
    inv_b = 1.0 / float(batch)          # stats over the TRUE batch only
    mask_rows = b_pad != batch

    def kernel(x_ref, *refs):
        w_refs = refs[:n_layers]
        vec_ref = refs[n_layers]
        out_ref = refs[n_layers + 1]
        h_ref = refs[n_layers + 2]      # VMEM scratch (b_pad, max_w) f32

        vecs = vec_ref[...]
        # Running activation lives in VMEM scratch; static lane-aligned views.
        h_ref[:, :padded[0]] = x_ref[...]
        if mask_rows:
            row_ok = lax.broadcasted_iota(jnp.int32, (b_pad, 1), 0) < batch

        for li in range(n_layers):
            is_last = li == n_layers - 1
            in_p, out_p = padded[li], padded[li + 1]
            w = w_refs[li][...]                       # (in_p, out_p)
            h_in = h_ref[:, :in_p]                    # (b_pad, in_p) f32
            if w.dtype != jnp.float32:                # bf16 MXU operands, f32 acc
                h_in = h_in.astype(w.dtype)
            h = jnp.dot(h_in, w, preferred_element_type=jnp.float32)

            if not is_last:
                gamma = vecs[2 * li:2 * li + 1, :out_p]      # (1, out_p)
                beta = vecs[2 * li + 1:2 * li + 2, :out_p]   # (1, out_p)
                # Fused BatchNorm1d (training stats) + ReLU in f32:
                # one sum / sumsq reduction, then a single FMA + max.
                mean = jnp.sum(h, axis=0, keepdims=True) * inv_b
                ex2 = jnp.sum(h * h, axis=0, keepdims=True) * inv_b
                var = ex2 - mean * mean
                scale = gamma * lax.rsqrt(var + BN_EPS)      # EUP slot
                shift = beta - mean * scale
                h = jnp.maximum(h * scale + shift, 0.0)
                if mask_rows:
                    # Keep padded rows exactly zero so next layer's stats are exact.
                    h = jnp.where(row_ok, h, 0.0)
                # Dropout(p=0.0) -> identity
                h_ref[:, :out_p] = h
            else:
                bias = vecs[2 * li:2 * li + 1, :out_p]
                h = h + bias
                if last_layer_act == "ReLU":
                    h = jnp.maximum(h, 0.0)
                out_ref[...] = h.astype(out_ref.dtype)       # lane-dense store

    return kernel


# --------------------------------------------------------------------------- #
# Forward factory: builds the pallas_call once, returns a jitted forward.
# --------------------------------------------------------------------------- #
def make_mlp_forward(sizes, batch, last_layer_act="linear", dot_dtype=jnp.float32):
    n_layers = len(sizes) - 1
    padded = _padded_sizes(sizes)
    max_out = max(padded[1:])
    max_w = max(padded)
    b_pad = _round_up(batch, SUBLANE)
    rows_pad = _round_up(2 * n_layers - 1, SUBLANE)

    kernel = _make_mlp_kernel(n_layers, padded, batch, b_pad, last_layer_act)

    # Explicit VMEM budget from actual packed sizes (+ headroom).
    dot_bytes = jnp.dtype(dot_dtype).itemsize
    w_bytes = sum(padded[i] * padded[i + 1] for i in range(n_layers)) * dot_bytes
    vec_bytes = 4 * rows_pad * max_out
    act_bytes = 4 * b_pad * (padded[0] + padded[-1] + max_w)
    vmem_limit = int(min(128 << 20,
                         max(16 << 20, 2 * (w_bytes + vec_bytes + act_bytes) + (4 << 20))))

    flops = 2 * sum(b_pad * padded[i] * padded[i + 1] for i in range(n_layers))
    transcendentals = (n_layers - 1) * max_out
    bytes_accessed = w_bytes + vec_bytes + 4 * b_pad * (padded[0] + padded[-1])

    vmem = pl.BlockSpec(memory_space=pltpu.MemorySpace.VMEM)
    call = pl.pallas_call(
        kernel,
        out_shape=jax.ShapeDtypeStruct((b_pad, padded[-1]), jnp.float32),
        in_specs=[vmem] * (1 + n_layers + 1),
        out_specs=vmem,
        scratch_shapes=[pltpu.VMEM((b_pad, max_w), jnp.float32)],
        compiler_params=pltpu.CompilerParams(vmem_limit_bytes=vmem_limit),
        cost_estimate=pl.CostEstimate(flops=flops,
                                      transcendentals=transcendentals,
                                      bytes_accessed=bytes_accessed),
    )

    in_dim, out_dim = sizes[0], sizes[-1]

    @jax.jit
    def forward(x, w_list, vec_all):
        # Single pad op (rows to sublane multiple, feature lanes to 128 multiple).
        x_pad = jnp.pad(x.astype(jnp.float32),
                        ((0, b_pad - batch), (0, padded[0] - in_dim)))
        out_pad = call(x_pad, *w_list, vec_all)
        # Slice padded rows/lanes away outside the kernel (keeps the store dense).
        return out_pad[:batch, :out_dim]

    return forward


# --------------------------------------------------------------------------- #
# Init + pure-JAX reference
# --------------------------------------------------------------------------- #
def init_params(key, sizes):
    """Deterministic init matching the module:
    Linear.weight: kaiming_uniform_ (a=0, fan_in, leaky_relu gain=sqrt(2))
                   -> U(-sqrt(6/fan_in), sqrt(6/fan_in))
    Linear.bias:   0.01
    BatchNorm1d:   gamma=1, beta=0
    Weights returned pre-transposed to (in, out).
    """
    params = []
    n_layers = len(sizes) - 1
    for s in range(n_layers):
        fan_in, fan_out = sizes[s], sizes[s + 1]
        key, wkey = jax.random.split(key)
        bound = float(jnp.sqrt(6.0 / fan_in))
        w = jax.random.uniform(wkey, (fan_in, fan_out), jnp.float32, -bound, bound)
        b = jnp.full((1, fan_out), 0.01, jnp.float32)
        params += [w, b]
        if s < n_layers - 1:  # hidden layers get BatchNorm1d params
            params += [jnp.ones((1, fan_out), jnp.float32),
                       jnp.zeros((1, fan_out), jnp.float32)]
    return params


def mlp_reference(x, params_flat, sizes, last_layer_act="linear"):
    """Pure-JAX reference of the same forward (keeps the bias + two-pass BN)."""
    n_layers = len(sizes) - 1
    h = x.astype(jnp.float32)
    idx = 0
    for li in range(n_layers):
        is_last = li == n_layers - 1
        w, b = params_flat[idx], params_flat[idx + 1]
        idx += 2
        h = h @ w + b
        if not is_last:
            gamma, beta = params_flat[idx], params_flat[idx + 1]
            idx += 2
            mean = jnp.mean(h, axis=0, keepdims=True)
            var = jnp.mean((h - mean) ** 2, axis=0, keepdims=True)
            h = (h - mean) / jnp.sqrt(var + BN_EPS) * gamma + beta
            h = jnp.maximum(h, 0.0)
    if last_layer_act == "ReLU":
        h = jnp.maximum(h, 0.0)
    return h


if __name__ == "__main__":
    # discriminator-classifier style sizes: input -> hidden -> hidden -> classes
    sizes = [32, 64, 64, 8]
    batch = 64                      # feeds more MXU rows than 16 while staying small
    last_layer_act = "linear"

    key = jax.random.PRNGKey(0)
    key, xkey = jax.random.split(key)
    x = jax.random.normal(xkey, (batch, sizes[0]), jnp.float32)

    params = init_params(jax.random.PRNGKey(0), sizes)

    # Pack ONCE at init time (hoisted out of the per-call path); f32 dot operands
    # at these tiny widths (use dot_dtype=jnp.bfloat16 for hidden widths >= ~512).
    w_list, vec_all = pack_params(params, sizes, dot_dtype=jnp.float32)
    forward = make_mlp_forward(sizes, batch, last_layer_act=last_layer_act,
                               dot_dtype=jnp.float32)

    out = jax.block_until_ready(forward(x, w_list, vec_all))

    ref = mlp_reference(x, params, sizes, last_layer_act=last_layer_act)
    assert out.shape == (batch, sizes[-1])
    assert bool(jnp.allclose(out, ref, atol=1e-4, rtol=1e-4)), "mismatch vs reference"

    print("KERNEL_OK")
</pallas_src>

<mosaic_0001>
module attributes {stable_mosaic.version = 11 : i64} {
  func.func @kernel(%arg0: memref<64x128xf32, #tpu.memory_space<vmem>>, %arg1: memref<128x128xf32, #tpu.memory_space<vmem>>, %arg2: memref<128x128xf32, #tpu.memory_space<vmem>>, %arg3: memref<128x128xf32, #tpu.memory_space<vmem>>, %arg4: memref<8x128xf32, #tpu.memory_space<vmem>>, %arg5: memref<64x128xf32, #tpu.memory_space<vmem>>, %arg6: memref<64x128xf32, #tpu.memory_space<vmem>>) attributes {dimension_semantics = [], scalar_prefetch = 0 : i64, scratch_operands = 1 : i64, tpu.core_type = #tpu.core_type<tc>} {
    %c0 = arith.constant 0 : index
    %c0_0 = arith.constant 0 : index
    %0 = vector.load %arg4[%c0, %c0_0] : memref<8x128xf32, #tpu.memory_space<vmem>>, vector<8x128xf32>
    %c0_1 = arith.constant 0 : index
    %c0_2 = arith.constant 0 : index
    %1 = vector.load %arg0[%c0_1, %c0_2] : memref<64x128xf32, #tpu.memory_space<vmem>>, vector<64x128xf32>
    %c0_3 = arith.constant 0 : index
    %c0_4 = arith.constant 0 : index
    %2 = vector.load %arg6[%c0_3, %c0_4] : memref<64x128xf32, #tpu.memory_space<vmem>>, vector<64x128xf32>
    tpu.vector_store %arg6[%c0_3, %c0_4], %1 {strides = array<i32>} : memref<64x128xf32, #tpu.memory_space<vmem>>, vector<64x128xf32>,
    %c0_5 = arith.constant 0 : index
    %c0_6 = arith.constant 0 : index
    %3 = vector.load %arg1[%c0_5, %c0_6] : memref<128x128xf32, #tpu.memory_space<vmem>>, vector<128x128xf32>
    %c0_7 = arith.constant 0 : index
    %c0_8 = arith.constant 0 : index
    %4 = vector.load %arg6[%c0_7, %c0_8] : memref<64x128xf32, #tpu.memory_space<vmem>>, vector<64x128xf32>
    %cst = arith.constant dense<0.000000e+00> : vector<64x128xf32>
    %5 = tpu.matmul %4, %3, %cst {dimension_numbers = #tpu.dot_dimension_numbers<[1], [0], [0], [1], [0, 0, 1, 1], [], []>} : vector<64x128xf32>, vector<128x128xf32>, vector<64x128xf32> -> vector<64x128xf32>
    %6 = vector.extract_strided_slice %0 {offsets = [0, 0], sizes = [1, 128], strides = [1, 1]} : vector<8x128xf32> to vector<1x128xf32>
    %7 = vector.extract_strided_slice %0 {offsets = [1, 0], sizes = [1, 128], strides = [1, 1]} : vector<8x128xf32> to vector<1x128xf32>
    %cst_9 = arith.constant dense<0.000000e+00> : vector<128xf32>
    %8 = vector.multi_reduction <add>, %5, %cst_9 [0] : vector<64x128xf32> to vector<128xf32>
    %9 = vector.shape_cast %8 : vector<128xf32> to vector<1x128xf32>
    %cst_10 = arith.constant 1.562500e-02 : f32
    %10 = vector.broadcast %cst_10 : f32 to vector<1x128xf32>
    %11 = arith.mulf %9, %10 : vector<1x128xf32>
    %12 = arith.mulf %5, %5 : vector<64x128xf32>
    %cst_11 = arith.constant dense<0.000000e+00> : vector<128xf32>
    %13 = vector.multi_reduction <add>, %12, %cst_11 [0] : vector<64x128xf32> to vector<128xf32>
    %14 = vector.shape_cast %13 : vector<128xf32> to vector<1x128xf32>
    %cst_12 = arith.constant 1.562500e-02 : f32
    %15 = vector.broadcast %cst_12 : f32 to vector<1x128xf32>
    %16 = arith.mulf %14, %15 : vector<1x128xf32>
    %17 = arith.mulf %11, %11 : vector<1x128xf32>
    %18 = arith.subf %16, %17 : vector<1x128xf32>
    %cst_13 = arith.constant 9.99999974E-6 : f32
    %19 = vector.broadcast %cst_13 : f32 to vector<1x128xf32>
    %20 = arith.addf %18, %19 : vector<1x128xf32>
    %21 = math.rsqrt %20 : vector<1x128xf32>
    %22 = arith.mulf %6, %21 : vector<1x128xf32>
    %23 = arith.mulf %11, %22 : vector<1x128xf32>
    %24 = arith.subf %7, %23 : vector<1x128xf32>
    %25 = vector.broadcast %22 : vector<1x128xf32> to vector<64x128xf32>
    %26 = arith.mulf %5, %25 : vector<64x128xf32>
    %27 = vector.broadcast %24 : vector<1x128xf32> to vector<64x128xf32>
    %28 = arith.addf %26, %27 : vector<64x128xf32>
    %cst_14 = arith.constant 0.000000e+00 : f32
    %29 = vector.broadcast %cst_14 : f32 to vector<64x128xf32>
    %30 = arith.maximumf %28, %29 : vector<64x128xf32>
    %c0_15 = arith.constant 0 : index
    %c0_16 = arith.constant 0 : index
    %31 = vector.load %arg6[%c0_15, %c0_16] : memref<64x128xf32, #tpu.memory_space<vmem>>, vector<64x128xf32>
    tpu.vector_store %arg6[%c0_15, %c0_16], %30 {strides = array<i32>} : memref<64x128xf32, #tpu.memory_space<vmem>>, vector<64x128xf32>,
    %c0_17 = arith.constant 0 : index
    %c0_18 = arith.constant 0 : index
    %32 = vector.load %arg2[%c0_17, %c0_18] : memref<128x128xf32, #tpu.memory_space<vmem>>, vector<128x128xf32>
    %c0_19 = arith.constant 0 : index
    %c0_20 = arith.constant 0 : index
    %33 = vector.load %arg6[%c0_19, %c0_20] : memref<64x128xf32, #tpu.memory_space<vmem>>, vector<64x128xf32>
    %cst_21 = arith.constant dense<0.000000e+00> : vector<64x128xf32>
    %34 = tpu.matmul %33, %32, %cst_21 {dimension_numbers = #tpu.dot_dimension_numbers<[1], [0], [0], [1], [0, 0, 1, 1], [], []>} : vector<64x128xf32>, vector<128x128xf32>, vector<64x128xf32> -> vector<64x128xf32>
    %35 = vector.extract_strided_slice %0 {offsets = [2, 0], sizes = [1, 128], strides = [1, 1]} : vector<8x128xf32> to vector<1x128xf32>
    %36 = vector.extract_strided_slice %0 {offsets = [3, 0], sizes = [1, 128], strides = [1, 1]} : vector<8x128xf32> to vector<1x128xf32>
    %cst_22 = arith.constant dense<0.000000e+00> : vector<128xf32>
    %37 = vector.multi_reduction <add>, %34, %cst_22 [0] : vector<64x128xf32> to vector<128xf32>
    %38 = vector.shape_cast %37 : vector<128xf32> to vector<1x128xf32>
    %cst_23 = arith.constant 1.562500e-02 : f32
    %39 = vector.broadcast %cst_23 : f32 to vector<1x128xf32>
    %40 = arith.mulf %38, %39 : vector<1x128xf32>
    %41 = arith.mulf %34, %34 : vector<64x128xf32>
    %cst_24 = arith.constant dense<0.000000e+00> : vector<128xf32>
    %42 = vector.multi_reduction <add>, %41, %cst_24 [0] : vector<64x128xf32> to vector<128xf32>
    %43 = vector.shape_cast %42 : vector<128xf32> to vector<1x128xf32>
    %cst_25 = arith.constant 1.562500e-02 : f32
    %44 = vector.broadcast %cst_25 : f32 to vector<1x128xf32>
    %45 = arith.mulf %43, %44 : vector<1x128xf32>
    %46 = arith.mulf %40, %40 : vector<1x128xf32>
    %47 = arith.subf %45, %46 : vector<1x128xf32>
    %cst_26 = arith.constant 9.99999974E-6 : f32
    %48 = vector.broadcast %cst_26 : f32 to vector<1x128xf32>
    %49 = arith.addf %47, %48 : vector<1x128xf32>
    %50 = math.rsqrt %49 : vector<1x128xf32>
    %51 = arith.mulf %35, %50 : vector<1x128xf32>
    %52 = arith.mulf %40, %51 : vector<1x128xf32>
    %53 = arith.subf %36, %52 : vector<1x128xf32>
    %54 = vector.broadcast %51 : vector<1x128xf32> to vector<64x128xf32>
    %55 = arith.mulf %34, %54 : vector<64x128xf32>
    %56 = vector.broadcast %53 : vector<1x128xf32> to vector<64x128xf32>
    %57 = arith.addf %55, %56 : vector<64x128xf32>
    %cst_27 = arith.constant 0.000000e+00 : f32
    %58 = vector.broadcast %cst_27 : f32 to vector<64x128xf32>
    %59 = arith.maximumf %57, %58 : vector<64x128xf32>
    %c0_28 = arith.constant 0 : index
    %c0_29 = arith.constant 0 : index
    %60 = vector.load %arg6[%c0_28, %c0_29] : memref<64x128xf32, #tpu.memory_space<vmem>>, vector<64x128xf32>
    tpu.vector_store %arg6[%c0_28, %c0_29], %59 {strides = array<i32>} : memref<64x128xf32, #tpu.memory_space<vmem>>, vector<64x128xf32>,
    %c0_30 = arith.constant 0 : index
    %c0_31 = arith.constant 0 : index
    %61 = vector.load %arg3[%c0_30, %c0_31] : memref<128x128xf32, #tpu.memory_space<vmem>>, vector<128x128xf32>
    %c0_32 = arith.constant 0 : index
    %c0_33 = arith.constant 0 : index
    %62 = vector.load %arg6[%c0_32, %c0_33] : memref<64x128xf32, #tpu.memory_space<vmem>>, vector<64x128xf32>
    %cst_34 = arith.constant dense<0.000000e+00> : vector<64x128xf32>
    %63 = tpu.matmul %62, %61, %cst_34 {dimension_numbers = #tpu.dot_dimension_numbers<[1], [0], [0], [1], [0, 0, 1, 1], [], []>} : vector<64x128xf32>, vector<128x128xf32>, vector<64x128xf32> -> vector<64x128xf32>
    %64 = vector.extract_strided_slice %0 {offsets = [4, 0], sizes = [1, 128], strides = [1, 1]} : vector<8x128xf32> to vector<1x128xf32>
    %65 = vector.broadcast %64 : vector<1x128xf32> to vector<64x128xf32>
    %66 = arith.addf %63, %65 : vector<64x128xf32>
    %c0_35 = arith.constant 0 : index
    %c0_36 = arith.constant 0 : index
    %67 = vector.load %arg5[%c0_35, %c0_36] : memref<64x128xf32, #tpu.memory_space<vmem>>, vector<64x128xf32>
    tpu.vector_store %arg5[%c0_35, %c0_36], %66 {strides = array<i32>} : memref<64x128xf32, #tpu.memory_space<vmem>>, vector<64x128xf32>,
    return
  }
}

</mosaic_0001>

<llo_original>
// kernel: forward.1
$region0: #{forward.1}
  #allocation0 [shape = 'u32[]', space=smem, size = 0x4, offset = 0x4, fixed_abs, tag = 'smem constant byte address 0x4 - core index']
  #allocation1 [shape = 'u32[144,128]{1,0:T(1,128)}', space=vmem, size = 0x12000, scoped, tag = 'internal scratch']
  #allocation2 [shape = 'f32[64,128]{1,0:T(8,128)}', space=vmem, size = 0x8000, scoped, tag = 'scratch operand']
  %s0 = inlined_call_operand.vmem [shape: f32[64,128], index: 0, kind: input, shape index: {}]
  %s1 = inlined_call_operand.vmem [shape: f32[128,128], index: 1, kind: input, shape index: {}]
  %s2 = inlined_call_operand.hbm [shape: f32[128,128], index: 2, kind: input, shape index: {}]
  %s3 = inlined_call_operand.hbm [shape: f32[128,128], index: 3, kind: input, shape index: {}]
  %s4 = inlined_call_operand.vmem [shape: f32[8,128], index: 4, kind: input, shape index: {}]
  %s5 = inlined_call_operand.vmem [shape: f32[64,128], index: 5, kind: output, shape index: {}]
  %s6 = sld [smem:[#allocation0]]
  $region38: #{forward.1} parent=0
    _
  %s8 = ssub.s32 1, %s6
  %s9 = scalar_select 0, %s8, %s6
  $region1: #{forward.1} parent=0
    #allocation3 [shape = 'u8[65536]{0}', space=vmem, size = 0x10000, scoped, tag = 'input window, operand 2, single buffered']
    #allocation4 [shape = 's32[1]{0}', space=sflag, size = 0x4, scoped, tag = 'scoped memory for forward.1']
    #allocation5 [shape = 'u8[65536]{0}', space=vmem, size = 0x10000, scoped, tag = 'input window, operand 3, single buffered']
    #allocation6 [shape = 's32[1]{0}', space=sflag, size = 0x4, scoped, tag = 'scoped memory for forward.1']
    %10 = vsyncpa [#allocation4], 0
    %11 = vsyncpa [#allocation6], 0
    // Predicated region
    $region2: #{forward.1} parent=1 // pred_check
      _
    $region3: #{forward.1} parent=1 // pred_check_branch
      %13 = sbr.rel (0) target = $region5
    $region4: #{forward.1} parent=1 // pred_region
      _
    $region5: #{forward.1} parent=1 // pred_fallthru
      _
    // Predicated region
    $region6: #{forward.1} parent=1 // pred_check
      _
    $region7: #{forward.1} parent=1 // pred_check_branch
      %15 = sbr.rel (0) target = $region9
    $region8: #{forward.1} parent=1 // pred_region
      _
    $region9: #{forward.1} parent=1 // pred_fallthru
      _
    // Predicated region
    $region10: #{forward.1} parent=1 // pred_check
      _
    $region11: #{forward.1} parent=1 // pred_check_branch
      %17 = sbr.rel (0) target = $region13
    $region12: #{forward.1} parent=1 // pred_region
      %s19 = ssub.s32 2048, 2048
      %20 = vsyncadd [#allocation4], %s19
      %s21 = sshll.u32 [#allocation3], 4
      %s22 = int_to_ptr.vmem [resolvable:$true] %s21
      %27 = dma.hbm_to_vmem [thread:$0]  %s2, 2048, %s22, [#allocation4], 128, 128, 8
    $region13: #{forward.1} parent=1 // pred_fallthru
      _
    // Predicated region
    $region14: #{forward.1} parent=1 // pred_check
      _
    $region15: #{forward.1} parent=1 // pred_check_branch
      %29 = sbr.rel (0) target = $region17
    $region16: #{forward.1} parent=1 // pred_region
      %s31 = ssub.s32 2048, 2048
      %32 = vsyncadd [#allocation6], %s31
      %s33 = sshll.u32 [#allocation5], 4
      %s34 = int_to_ptr.vmem [resolvable:$true] %s33
      %39 = dma.hbm_to_vmem [thread:$0]  %s3, 2048, %s34, [#allocation6], 128, 128, 8
    $region17: #{forward.1} parent=1 // pred_fallthru
      _
    // Predicated region
    $region18: #{forward.1} parent=1 // pred_check
      _
    $region19: #{forward.1} parent=1 // pred_check_branch
      %41 = sbr.rel (0) target = $region21
    $region20: #{forward.1} parent=1 // pred_region
      _
    $region21: #{forward.1} parent=1 // pred_fallthru
      _
    // Predicated region
    $region22: #{forward.1} parent=1 // pred_check
      _
    $region23: #{forward.1} parent=1 // pred_check_branch
      %43 = sbr.rel (0) target = $region25
    $region24: #{forward.1} parent=1 // pred_region
      %44 = dma.done [#allocation4], 2048
    $region25: #{forward.1} parent=1 // pred_fallthru
      _
    // Predicated region
    $region26: #{forward.1} parent=1 // pred_check
      _
    $region27: #{forward.1} parent=1 // pred_check_branch
      %46 = sbr.rel (0) target = $region29
    $region28: #{forward.1} parent=1 // pred_region
      %47 = dma.done [#allocation6], 2048
    $region29: #{forward.1} parent=1 // pred_fallthru
      _
    %v48 = vld [vmem:[%s4] sm:$0xff]
    %v49 = vld [vmem:[%s0] sm:$0xff]
    %v50 = vld [vmem:[%s0 + $0x8] sm:$0xff]
    %v51 = vld [vmem:[%s0 + $0x10] sm:$0xff]
    %v52 = vld [vmem:[%s0 + $0x18] sm:$0xff]
    %v53 = vld [vmem:[%s0 + $0x20] sm:$0xff]
    %v54 = vld [vmem:[%s0 + $0x28] sm:$0xff]
    %v55 = vld [vmem:[%s0 + $0x30] sm:$0xff]
    %v56 = vld [vmem:[%s0 + $0x38] sm:$0xff]
    %57 = vst [vmem:[#allocation2] sm:$0xff] %v49
    %58 = vst [vmem:[#allocation2 + $0x8] sm:$0xff] %v50
    %59 = vst [vmem:[#allocation2 + $0x10] sm:$0xff] %v51
    %60 = vst [vmem:[#allocation2 + $0x18] sm:$0xff] %v52
    %61 = vst [vmem:[#allocation2 + $0x20] sm:$0xff] %v53
    %62 = vst [vmem:[#allocation2 + $0x28] sm:$0xff] %v54
    %63 = vst [vmem:[#allocation2 + $0x30] sm:$0xff] %v55
    %64 = vst [vmem:[#allocation2 + $0x38] sm:$0xff] %v56
    %v65 = vld [vmem:[%s1] sm:$0xff]
    %v66 = vld [vmem:[%s1 + $0x8] sm:$0xff]
    %v67 = vld [vmem:[%s1 + $0x10] sm:$0xff]
    %v68 = vld [vmem:[%s1 + $0x18] sm:$0xff]
    %v69 = vld [vmem:[%s1 + $0x20] sm:$0xff]
    %v70 = vld [vmem:[%s1 + $0x28] sm:$0xff]
    %v71 = vld [vmem:[%s1 + $0x30] sm:$0xff]
    %v72 = vld [vmem:[%s1 + $0x38] sm:$0xff]
    %v73 = vld [vmem:[%s1 + $0x40] sm:$0xff]
    %v74 = vld [vmem:[%s1 + $0x48] sm:$0xff]
    %v75 = vld [vmem:[%s1 + $0x50] sm:$0xff]
    %v76 = vld [vmem:[%s1 + $0x58] sm:$0xff]
    %v77 = vld [vmem:[%s1 + $0x60] sm:$0xff]
    %v78 = vld [vmem:[%s1 + $0x68] sm:$0xff]
    %v79 = vld [vmem:[%s1 + $0x70] sm:$0xff]
    %v80 = vld [vmem:[%s1 + $0x78] sm:$0xff]
    %v81 = vld [vmem:[#allocation2] sm:$0xff]
    %v82 = vld [vmem:[#allocation2 + $0x8] sm:$0xff]
    %v83 = vld [vmem:[#allocation2 + $0x10] sm:$0xff]
    %v84 = vld [vmem:[#allocation2 + $0x18] sm:$0xff]
    %v85 = vld [vmem:[#allocation2 + $0x20] sm:$0xff]
    %v86 = vld [vmem:[#allocation2 + $0x28] sm:$0xff]
    %v87 = vld [vmem:[#allocation2 + $0x30] sm:$0xff]
    %v88 = vld [vmem:[#allocation2 + $0x38] sm:$0xff]
    %89 = vmatprep.subr.mxu0 0.0
    %90 = vmatpush1.msra.mxu0 %v65
    %91 = vmatprep.subr.mxu0 0.0
    %92 = vmatpush1.msra.mxu0 %v66
    %93 = vmatprep.subr.mxu0 0.0
    %94 = vmatpush1.msra.mxu0 %v67
    %95 = vmatprep.subr.mxu0 0.0
    %96 = vmatpush1.msra.mxu0 %v68
    %97 = vmatprep.subr.mxu0 0.0
    %98 = vmatpush1.msra.mxu0 %v69
    %99 = vmatprep.subr.mxu0 0.0
    %100 = vmatpush1.msra.mxu0 %v70
    %101 = vmatprep.subr.mxu0 0.0
    %102 = vmatpush1.msra.mxu0 %v71
    %103 = vmatprep.subr.mxu0 0.0
    %104 = vmatpush1.msra.mxu0 %v72
    %105 = vmatprep.subr.mxu0 0.0
    %106 = vmatpush1.msra.mxu0 %v73
    %107 = vmatprep.subr.mxu0 0.0
    %108 = vmatpush1.msra.mxu0 %v74
    %109 = vmatprep.subr.mxu0 0.0
    %110 = vmatpush1.msra.mxu0 %v75
    %111 = vmatprep.subr.mxu0 0.0
    %112 = vmatpush1.msra.mxu0 %v76
    %113 = vmatprep.subr.mxu0 0.0
    %114 = vmatpush1.msra.mxu0 %v77
    %115 = vmatprep.subr.mxu0 0.0
    %116 = vmatpush1.msra.mxu0 %v78
    %117 = vmatprep.subr.mxu0 0.0
    %118 = vmatpush1.msra.mxu0 %v79
    %119 = vmatprep.subr.mxu0 0.0
    %120 = vmatpush1.msra.mxu0 %v80
    %121 = vmatprep.subr.mxu0 0.0
    %122 = vmatpush1.msra.mxu0 0.0
    %123 = vmatprep.subr.mxu0 0.0
    %124 = vmatpush1.msra.mxu0 0.0
    %125 = vmatprep.subr.mxu0 0.0
    %126 = vmatpush1.msra.mxu0 0.0
    %127 = vmatprep.subr.mxu0 0.0
    %128 = vmatpush1.msra.mxu0 0.0
    %129 = vmatprep.subr.mxu0 0.0
    %130 = vmatpush1.msra.mxu0 0.0
    %131 = vmatprep.subr.mxu0 0.0
    %132 = vmatpush1.msra.mxu0 0.0
    %133 = vmatprep.subr.mxu0 0.0
    %134 = vmatpush1.msra.mxu0 0.0
    %135 = vmatprep.subr.mxu0 0.0
    %136 = vmatpush1.msra.mxu0 0.0
    %137 = vmatprep.subr.mxu0 0.0
    %138 = vmatpush1.msra.mxu0 0.0
    %139 = vmatprep.subr.mxu0 0.0
    %140 = vmatpush1.msra.mxu0 0.0
    %141 = vmatprep.subr.mxu0 0.0
    %142 = vmatpush1.msra.mxu0 0.0
    %143 = vmatprep.subr.mxu0 0.0
    %144 = vmatpush1.msra.mxu0 0.0
    %145 = vmatprep.subr.mxu0 0.0
    %146 = vmatpush1.msra.mxu0 0.0
    %147 = vmatprep.subr.mxu0 0.0
    %148 = vmatpush1.msra.mxu0 0.0
    %149 = vmatprep.subr.mxu0 0.0
    %150 = vmatpush1.msra.mxu0 0.0
    %151 = vmatprep.subr.mxu0 0.0
    %152 = vmatpush1.msra.mxu0 0.0
    %153 = vmatprep.mubr.f32.mxu0 0.0
    %154 = vmatmul.mubr.f32.gmra.mrb[0].mxu0 %v81
    %v155 = vpop.f32.mrb[0].mxu0
    %v156 = vadd.f32 0.0, %v155
    %v157 = vpop.f32.mrb[0].mxu0
    %158 = vmatprep.mubr.f32.mxu0 0.0
    %159 = vmatmul.mubr.f32.gmra.mrb[0].mxu0 %v82
    %v160 = vpop.f32.mrb[0].mxu0
    %v161 = vadd.f32 0.0, %v160
    %v162 = vpop.f32.mrb[0].mxu0
    %163 = vmatprep.mubr.f32.mxu0 0.0
    %164 = vmatmul.mubr.f32.gmra.mrb[0].mxu0 %v83
    %v165 = vpop.f32.mrb[0].mxu0
    %v166 = vadd.f32 0.0, %v165
    %v167 = vpop.f32.mrb[0].mxu0
    %168 = vmatprep.mubr.f32.mxu0 0.0
    %169 = vmatmul.mubr.f32.gmra.mrb[0].mxu0 %v84
    %v170 = vpop.f32.mrb[0].mxu0
    %v171 = vadd.f32 0.0, %v170
    %v172 = vpop.f32.mrb[0].mxu0
    %173 = vmatprep.mubr.f32.mxu0 0.0
    %174 = vmatmul.mubr.f32.gmra.mrb[0].mxu0 %v85
    %v175 = vpop.f32.mrb[0].mxu0
    %v176 = vadd.f32 0.0, %v175
    %v177 = vpop.f32.mrb[0].mxu0
    %178 = vmatprep.mubr.f32.mxu0 0.0
    %179 = vmatmul.mubr.f32.gmra.mrb[0].mxu0 %v86
    %v180 = vpop.f32.mrb[0].mxu0
    %v181 = vadd.f32 0.0, %v180
    %v182 = vpop.f32.mrb[0].mxu0
    %183 = vmatprep.mubr.f32.mxu0 0.0
    %184 = vmatmul.mubr.f32.gmra.mrb[0].mxu0 %v87
    %v185 = vpop.f32.mrb[0].mxu0
    %v186 = vadd.f32 0.0, %v185
    %v187 = vpop.f32.mrb[0].mxu0
    %188 = vmatprep.mubr.f32.mxu0 0.0
    %189 = vmatmul.mubr.f32.gmra.mrb[0].mxu0 %v88
    %v190 = vpop.f32.mrb[0].mxu0
    %v191 = vadd.f32 0.0, %v190
    %v192 = vpop.f32.mrb[0].mxu0
    %193 = vdwg.mxu0
    %v194 = vadd.f32 %v156, %v161
    %v195 = vadd.f32 %v194, %v166
    %v196 = vadd.f32 %v195, %v171
    %v197 = vadd.f32 %v196, %v176
    %v198 = vadd.f32 %v197, %v181
    %v199 = vadd.f32 %v198, %v186
    %v200 = vadd.f32 %v199, %v191
    %v201 = vrot.slane %v200, 4
    %v202 = vadd.f32 %v200, %v201
    %v203 = vrot.slane %v202, 2
    %v204 = vadd.f32 %v202, %v203
    %v205 = vrot.slane %v204, 1
    %v206 = vadd.f32 %v204, %v205
    %v207 = vmul.f32 %v206, 0.015625
    %v208 = vmul.f32 %v156, %v156
    %v209 = vmul.f32 %v161, %v161
    %v210 = vmul.f32 %v166, %v166
    %v211 = vmul.f32 %v171, %v171
    %v212 = vmul.f32 %v176, %v176
    %v213 = vmul.f32 %v181, %v181
    %v214 = vmul.f32 %v186, %v186
    %v215 = vmul.f32 %v191, %v191
    %v216 = vadd.f32 %v208, %v209
    %v217 = vadd.f32 %v216, %v210
    %v218 = vadd.f32 %v217, %v211
    %v219 = vadd.f32 %v218, %v212
    %v220 = vadd.f32 %v219, %v213
    %v221 = vadd.f32 %v220, %v214
    %v222 = vadd.f32 %v221, %v215
    %v223 = vrot.slane %v222, 4
    %v224 = vadd.f32 %v222, %v223
    %v225 = vrot.slane %v224, 2
    %v226 = vadd.f32 %v224, %v225
    %v227 = vrot.slane %v226, 1
    %v228 = vadd.f32 %v226, %v227
    %v229 = vmul.f32 %v228, 0.015625
    %v230 = vmul.f32 %v207, %v207
    %v231 = vsub.f32 %v229, %v230
    %v232 = vadd.f32 %v231, 1e-05
    %v233 = vrsqrt.pop %v232
    %v234 = vmul.f32 %v48, %v233
    %v235 = vmul.f32 %v207, %v234
    %v237 = vrot.slane %v235, 7
    %v239 = vsub.f32 %v48, %v237
    %v240 = vlaneseq
    %v241 = vshrl.u32 %v240, 7
    %v242 = vsub.s32 0, %v241
    %v243 = vrot.slane %v234, %v242
    %v244 = vmul.f32 %v156, %v243
    %v245 = vmul.f32 %v161, %v243
    %v246 = vmul.f32 %v166, %v243
    %v247 = vmul.f32 %v171, %v243
    %v248 = vmul.f32 %v176, %v243
    %v249 = vmul.f32 %v181, %v243
    %v250 = vmul.f32 %v186, %v243
    %v251 = vmul.f32 %v191, %v243
    %v252 = vlaneseq
    %v253 = vshrl.u32 %v252, 7
    %v254 = vsub.s32 1, %v253
    %v255 = vrot.slane %v239, %v254
    %v256 = vadd.f32 %v244, %v255
    %v257 = vadd.f32 %v245, %v255
    %v258 = vadd.f32 %v246, %v255
    %v259 = vadd.f32 %v247, %v255
    %v260 = vadd.f32 %v248, %v255
    %v261 = vadd.f32 %v249, %v255
    %v262 = vadd.f32 %v250, %v255
    %v263 = vadd.f32 %v251, %v255
    %v264 = vmax.f32 %v256, 0.0
    %v265 = vmax.f32 %v257, 0.0
    %v266 = vmax.f32 %v258, 0.0
    %v267 = vmax.f32 %v259, 0.0
    %v268 = vmax.f32 %v260, 0.0
    %v269 = vmax.f32 %v261, 0.0
    %v270 = vmax.f32 %v262, 0.0
    %v271 = vmax.f32 %v263, 0.0
    %272 = vst [vmem:[#allocation2] sm:$0xff] %v264
    %273 = vst [vmem:[#allocation2 + $0x8] sm:$0xff] %v265
    %274 = vst [vmem:[#allocation2 + $0x10] sm:$0xff] %v266
    %275 = vst [vmem:[#allocation2 + $0x18] sm:$0xff] %v267
    %276 = vst [vmem:[#allocation2 + $0x20] sm:$0xff] %v268
    %277 = vst [vmem:[#allocation2 + $0x28] sm:$0xff] %v269
    %278 = vst [vmem:[#allocation2 + $0x30] sm:$0xff] %v270
    %279 = vst [vmem:[#allocation2 + $0x38] sm:$0xff] %v271
    %v280 = vld [vmem:[#allocation3] sm:$0xff]
    %v281 = vld [vmem:[#allocation3 + $0x8] sm:$0xff]
    %v282 = vld [vmem:[#allocation3 + $0x10] sm:$0xff]
    %v283 = vld [vmem:[#allocation3 + $0x18] sm:$0xff]
    %v284 = vld [vmem:[#allocation3 + $0x20] sm:$0xff]
    %v285 = vld [vmem:[#allocation3 + $0x28] sm:$0xff]
    %v286 = vld [vmem:[#allocation3 + $0x30] sm:$0xff]
    %v287 = vld [vmem:[#allocation3 + $0x38] sm:$0xff]
    %v288 = vld [vmem:[#allocation3 + $0x40] sm:$0xff]
    %v289 = vld [vmem:[#allocation3 + $0x48] sm:$0xff]
    %v290 = vld [vmem:[#allocation3 + $0x50] sm:$0xff]
    %v291 = vld [vmem:[#allocation3 + $0x58] sm:$0xff]
    %v292 = vld [vmem:[#allocation3 + $0x60] sm:$0xff]
    %v293 = vld [vmem:[#allocation3 + $0x68] sm:$0xff]
    %v294 = vld [vmem:[#allocation3 + $0x70] sm:$0xff]
    %v295 = vld [vmem:[#allocation3 + $0x78] sm:$0xff]
    %v296 = vld [vmem:[#allocation2] sm:$0xff]
    %v297 = vld [vmem:[#allocation2 + $0x8] sm:$0xff]
    %v298 = vld [vmem:[#allocation2 + $0x10] sm:$0xff]
    %v299 = vld [vmem:[#allocation2 + $0x18] sm:$0xff]
    %v300 = vld [vmem:[#allocation2 + $0x20] sm:$0xff]
    %v301 = vld [vmem:[#allocation2 + $0x28] sm:$0xff]
    %v302 = vld [vmem:[#allocation2 + $0x30] sm:$0xff]
    %v303 = vld [vmem:[#allocation2 + $0x38] sm:$0xff]
    %304 = vmatprep.subr.mxu0 0.0
    %305 = vmatpush1.msra.mxu0 %v280
    %306 = vmatprep.subr.mxu0 0.0
    %307 = vmatpush1.msra.mxu0 %v281
    %308 = vmatprep.subr.mxu0 0.0
    %309 = vmatpush1.msra.mxu0 %v282
    %310 = vmatprep.subr.mxu0 0.0
    %311 = vmatpush1.msra.mxu0 %v283
    %312 = vmatprep.subr.mxu0 0.0
    %313 = vmatpush1.msra.mxu0 %v284
    %314 = vmatprep.subr.mxu0 0.0
    %315 = vmatpush1.msra.mxu0 %v285
    %316 = vmatprep.subr.mxu0 0.0
    %317 = vmatpush1.msra.mxu0 %v286
    %318 = vmatprep.subr.mxu0 0.0
    %319 = vmatpush1.msra.mxu0 %v287
    %320 = vmatprep.subr.mxu0 0.0
    %321 = vmatpush1.msra.mxu0 %v288
    %322 = vmatprep.subr.mxu0 0.0
    %323 = vmatpush1.msra.mxu0 %v289
    %324 = vmatprep.subr.mxu0 0.0
    %325 = vmatpush1.msra.mxu0 %v290
    %326 = vmatprep.subr.mxu0 0.0
    %327 = vmatpush1.msra.mxu0 %v291
    %328 = vmatprep.subr.mxu0 0.0
    %329 = vmatpush1.msra.mxu0 %v292
    %330 = vmatprep.subr.mxu0 0.0
    %331 = vmatpush1.msra.mxu0 %v293
    %332 = vmatprep.subr.mxu0 0.0
    %333 = vmatpush1.msra.mxu0 %v294
    %334 = vmatprep.subr.mxu0 0.0
    %335 = vmatpush1.msra.mxu0 %v295
    %336 = vmatprep.subr.mxu0 0.0
    %337 = vmatpush1.msra.mxu0 0.0
    %338 = vmatprep.subr.mxu0 0.0
    %339 = vmatpush1.msra.mxu0 0.0
    %340 = vmatprep.subr.mxu0 0.0
    %341 = vmatpush1.msra.mxu0 0.0
    %342 = vmatprep.subr.mxu0 0.0
    %343 = vmatpush1.msra.mxu0 0.0
    %344 = vmatprep.subr.mxu0 0.0
    %345 = vmatpush1.msra.mxu0 0.0
    %346 = vmatprep.subr.mxu0 0.0
    %347 = vmatpush1.msra.mxu0 0.0
    %348 = vmatprep.subr.mxu0 0.0
    %349 = vmatpush1.msra.mxu0 0.0
    %350 = vmatprep.subr.mxu0 0.0
    %351 = vmatpush1.msra.mxu0 0.0
    %352 = vmatprep.subr.mxu0 0.0
    %353 = vmatpush1.msra.mxu0 0.0
    %354 = vmatprep.subr.mxu0 0.0
    %355 = vmatpush1.msra.mxu0 0.0
    %356 = vmatprep.subr.mxu0 0.0
    %357 = vmatpush1.msra.mxu0 0.0
    %358 = vmatprep.subr.mxu0 0.0
    %359 = vmatpush1.msra.mxu0 0.0
    %360 = vmatprep.subr.mxu0 0.0
    %361 = vmatpush1.msra.mxu0 0.0
    %362 = vmatprep.subr.mxu0 0.0
    %363 = vmatpush1.msra.mxu0 0.0
    %364 = vmatprep.subr.mxu0 0.0
    %365 = vmatpush1.msra.mxu0 0.0
    %366 = vmatprep.subr.mxu0 0.0
    %367 = vmatpush1.msra.mxu0 0.0
    %368 = vmatprep.mubr.f32.mxu0 0.0
    %369 = vmatmul.mubr.f32.gmra.mrb[0].mxu0 %v296
    %v370 = vpop.f32.mrb[0].mxu0
    %v371 = vadd.f32 0.0, %v370
    %v372 = vpop.f32.mrb[0].mxu0
    %373 = vmatprep.mubr.f32.mxu0 0.0
    %374 = vmatmul.mubr.f32.gmra.mrb[0].mxu0 %v297
    %v375 = vpop.f32.mrb[0].mxu0
    %v376 = vadd.f32 0.0, %v375
    %v377 = vpop.f32.mrb[0].mxu0
    %378 = vmatprep.mubr.f32.mxu0 0.0
    %379 = vmatmul.mubr.f32.gmra.mrb[0].mxu0 %v298
    %v380 = vpop.f32.mrb[0].mxu0
    %v381 = vadd.f32 0.0, %v380
    %v382 = vpop.f32.mrb[0].mxu0
    %383 = vmatprep.mubr.f32.mxu0 0.0
    %384 = vmatmul.mubr.f32.gmra.mrb[0].mxu0 %v299
    %v385 = vpop.f32.mrb[0].mxu0
    %v386 = vadd.f32 0.0, %v385
    %v387 = vpop.f32.mrb[0].mxu0
    %388 = vmatprep.mubr.f32.mxu0 0.0
    %389 = vmatmul.mubr.f32.gmra.mrb[0].mxu0 %v300
    %v390 = vpop.f32.mrb[0].mxu0
    %v391 = vadd.f32 0.0, %v390
    %v392 = vpop.f32.mrb[0].mxu0
    %393 = vmatprep.mubr.f32.mxu0 0.0
    %394 = vmatmul.mubr.f32.gmra.mrb[0].mxu0 %v301
    %v395 = vpop.f32.mrb[0].mxu0
    %v396 = vadd.f32 0.0, %v395
    %v397 = vpop.f32.mrb[0].mxu0
    %398 = vmatprep.mubr.f32.mxu0 0.0
    %399 = vmatmul.mubr.f32.gmra.mrb[0].mxu0 %v302
    %v400 = vpop.f32.mrb[0].mxu0
    %v401 = vadd.f32 0.0, %v400
    %v402 = vpop.f32.mrb[0].mxu0
    %403 = vmatprep.mubr.f32.mxu0 0.0
    %404 = vmatmul.mubr.f32.gmra.mrb[0].mxu0 %v303
    %v405 = vpop.f32.mrb[0].mxu0
    %v406 = vadd.f32 0.0, %v405
    %v407 = vpop.f32.mrb[0].mxu0
    %408 = vdwg.mxu0
    %v409 = vadd.f32 %v371, %v376
    %v410 = vadd.f32 %v409, %v381
    %v411 = vadd.f32 %v410, %v386
    %v412 = vadd.f32 %v411, %v391
    %v413 = vadd.f32 %v412, %v396
    %v414 = vadd.f32 %v413, %v401
    %v415 = vadd.f32 %v414, %v406
    %v416 = vrot.slane %v415, 4
    %v417 = vadd.f32 %v415, %v416
    %v418 = vrot.slane %v417, 2
    %v419 = vadd.f32 %v417, %v418
    %v420 = vrot.slane %v419, 1
    %v421 = vadd.f32 %v419, %v420
    %v422 = vmul.f32 %v421, 0.015625
    %v423 = vmul.f32 %v371, %v371
    %v424 = vmul.f32 %v376, %v376
    %v425 = vmul.f32 %v381, %v381
    %v426 = vmul.f32 %v386, %v386
    %v427 = vmul.f32 %v391, %v391
    %v428 = vmul.f32 %v396, %v396
    %v429 = vmul.f32 %v401, %v401
    %v430 = vmul.f32 %v406, %v406
    %v431 = vadd.f32 %v423, %v424
    %v432 = vadd.f32 %v431, %v425
    %v433 = vadd.f32 %v432, %v426
    %v434 = vadd.f32 %v433, %v427
    %v435 = vadd.f32 %v434, %v428
    %v436 = vadd.f32 %v435, %v429
    %v437 = vadd.f32 %v436, %v430
    %v438 = vrot.slane %v437, 4
    %v439 = vadd.f32 %v437, %v438
    %v440 = vrot.slane %v439, 2
    %v441 = vadd.f32 %v439, %v440
    %v442 = vrot.slane %v441, 1
    %v443 = vadd.f32 %v441, %v442
    %v444 = vmul.f32 %v443, 0.015625
    %v445 = vmul.f32 %v422, %v422
    %v446 = vsub.f32 %v444, %v445
    %v447 = vadd.f32 %v446, 1e-05
    %v448 = vrsqrt.pop %v447
    %v449 = vmul.f32 %v48, %v448
    %v450 = vmul.f32 %v422, %v449
    %v452 = vrot.slane %v450, 7
    %v454 = vsub.f32 %v48, %v452
    %v455 = vlaneseq
    %v456 = vshrl.u32 %v455, 7
    %v457 = vsub.s32 2, %v456
    %v458 = vrot.slane %v449, %v457
    %v459 = vmul.f32 %v371, %v458
    %v460 = vmul.f32 %v376, %v458
    %v461 = vmul.f32 %v381, %v458
    %v462 = vmul.f32 %v386, %v458
    %v463 = vmul.f32 %v391, %v458
    %v464 = vmul.f32 %v396, %v458
    %v465 = vmul.f32 %v401, %v458
    %v466 = vmul.f32 %v406, %v458
    %v467 = vlaneseq
    %v468 = vshrl.u32 %v467, 7
    %v469 = vsub.s32 3, %v468
    %v470 = vrot.slane %v454, %v469
    %v471 = vadd.f32 %v459, %v470
    %v472 = vadd.f32 %v460, %v470
    %v473 = vadd.f32 %v461, %v470
    %v474 = vadd.f32 %v462, %v470
    %v475 = vadd.f32 %v463, %v470
    %v476 = vadd.f32 %v464, %v470
    %v477 = vadd.f32 %v465, %v470
    %v478 = vadd.f32 %v466, %v470
    %v479 = vmax.f32 %v471, 0.0
    %v480 = vmax.f32 %v472, 0.0
    %v481 = vmax.f32 %v473, 0.0
    %v482 = vmax.f32 %v474, 0.0
    %v483 = vmax.f32 %v475, 0.0
    %v484 = vmax.f32 %v476, 0.0
    %v485 = vmax.f32 %v477, 0.0
    %v486 = vmax.f32 %v478, 0.0
    %487 = vst [vmem:[#allocation2] sm:$0xff] %v479
    %488 = vst [vmem:[#allocation2 + $0x8] sm:$0xff] %v480
    %489 = vst [vmem:[#allocation2 + $0x10] sm:$0xff] %v481
    %490 = vst [vmem:[#allocation2 + $0x18] sm:$0xff] %v482
    %491 = vst [vmem:[#allocation2 + $0x20] sm:$0xff] %v483
    %492 = vst [vmem:[#allocation2 + $0x28] sm:$0xff] %v484
    %493 = vst [vmem:[#allocation2 + $0x30] sm:$0xff] %v485
    %494 = vst [vmem:[#allocation2 + $0x38] sm:$0xff] %v486
    %v495 = vld [vmem:[#allocation5] sm:$0xff]
    %v496 = vld [vmem:[#allocation5 + $0x8] sm:$0xff]
    %v497 = vld [vmem:[#allocation5 + $0x10] sm:$0xff]
    %v498 = vld [vmem:[#allocation5 + $0x18] sm:$0xff]
    %v499 = vld [vmem:[#allocation5 + $0x20] sm:$0xff]
    %v500 = vld [vmem:[#allocation5 + $0x28] sm:$0xff]
    %v501 = vld [vmem:[#allocation5 + $0x30] sm:$0xff]
    %v502 = vld [vmem:[#allocation5 + $0x38] sm:$0xff]
    %v503 = vld [vmem:[#allocation5 + $0x40] sm:$0xff]
    %v504 = vld [vmem:[#allocation5 + $0x48] sm:$0xff]
    %v505 = vld [vmem:[#allocation5 + $0x50] sm:$0xff]
    %v506 = vld [vmem:[#allocation5 + $0x58] sm:$0xff]
    %v507 = vld [vmem:[#allocation5 + $0x60] sm:$0xff]
    %v508 = vld [vmem:[#allocation5 + $0x68] sm:$0xff]
    %v509 = vld [vmem:[#allocation5 + $0x70] sm:$0xff]
    %v510 = vld [vmem:[#allocation5 + $0x78] sm:$0xff]
    %v511 = vld [vmem:[#allocation2] sm:$0xff]
    %v512 = vld [vmem:[#allocation2 + $0x8] sm:$0xff]
    %v513 = vld [vmem:[#allocation2 + $0x10] sm:$0xff]
    %v514 = vld [vmem:[#allocation2 + $0x18] sm:$0xff]
    %v515 = vld [vmem:[#allocation2 + $0x20] sm:$0xff]
    %v516 = vld [vmem:[#allocation2 + $0x28] sm:$0xff]
    %v517 = vld [vmem:[#allocation2 + $0x30] sm:$0xff]
    %v518 = vld [vmem:[#allocation2 + $0x38] sm:$0xff]
    %v519 = vlaneseq
    %v520 = vshrl.u32 %v519, 7
    %v521 = vsub.s32 4, %v520
    %v522 = vrot.slane %v48, %v521
    %523 = vmatprep.subr.mxu0 0.0
    %524 = vmatpush1.msra.mxu0 %v495
    %525 = vmatprep.subr.mxu0 0.0
    %526 = vmatpush1.msra.mxu0 %v496
    %527 = vmatprep.subr.mxu0 0.0
    %528 = vmatpush1.msra.mxu0 %v497
    %529 = vmatprep.subr.mxu0 0.0
    %530 = vmatpush1.msra.mxu0 %v498
    %531 = vmatprep.subr.mxu0 0.0
    %532 = vmatpush1.msra.mxu0 %v499
    %533 = vmatprep.subr.mxu0 0.0
    %534 = vmatpush1.msra.mxu0 %v500
    %535 = vmatprep.subr.mxu0 0.0
    %536 = vmatpush1.msra.mxu0 %v501
    %537 = vmatprep.subr.mxu0 0.0
    %538 = vmatpush1.msra.mxu0 %v502
    %539 = vmatprep.subr.mxu0 0.0
    %540 = vmatpush1.msra.mxu0 %v503
    %541 = vmatprep.subr.mxu0 0.0
    %542 = vmatpush1.msra.mxu0 %v504
    %543 = vmatprep.subr.mxu0 0.0
    %544 = vmatpush1.msra.mxu0 %v505
    %545 = vmatprep.subr.mxu0 0.0
    %546 = vmatpush1.msra.mxu0 %v506
    %547 = vmatprep.subr.mxu0 0.0
    %548 = vmatpush1.msra.mxu0 %v507
    %549 = vmatprep.subr.mxu0 0.0
    %550 = vmatpush1.msra.mxu0 %v508
    %551 = vmatprep.subr.mxu0 0.0
    %552 = vmatpush1.msra.mxu0 %v509
    %553 = vmatprep.subr.mxu0 0.0
    %554 = vmatpush1.msra.mxu0 %v510
    %555 = vmatprep.subr.mxu0 0.0
    %556 = vmatpush1.msra.mxu0 0.0
    %557 = vmatprep.subr.mxu0 0.0
    %558 = vmatpush1.msra.mxu0 0.0
    %559 = vmatprep.subr.mxu0 0.0
    %560 = vmatpush1.msra.mxu0 0.0
    %561 = vmatprep.subr.mxu0 0.0
    %562 = vmatpush1.msra.mxu0 0.0
    %563 = vmatprep.subr.mxu0 0.0
    %564 = vmatpush1.msra.mxu0 0.0
    %565 = vmatprep.subr.mxu0 0.0
    %566 = vmatpush1.msra.mxu0 0.0
    %567 = vmatprep.subr.mxu0 0.0
    %568 = vmatpush1.msra.mxu0 0.0
    %569 = vmatprep.subr.mxu0 0.0
    %570 = vmatpush1.msra.mxu0 0.0
    %571 = vmatprep.subr.mxu0 0.0
    %572 = vmatpush1.msra.mxu0 0.0
    %573 = vmatprep.subr.mxu0 0.0
    %574 = vmatpush1.msra.mxu0 0.0
    %575 = vmatprep.subr.mxu0 0.0
    %576 = vmatpush1.msra.mxu0 0.0
    %577 = vmatprep.subr.mxu0 0.0
    %578 = vmatpush1.msra.mxu0 0.0
    %579 = vmatprep.subr.mxu0 0.0
    %580 = vmatpush1.msra.mxu0 0.0
    %581 = vmatprep.subr.mxu0 0.0
    %582 = vmatpush1.msra.mxu0 0.0
    %583 = vmatprep.subr.mxu0 0.0
    %584 = vmatpush1.msra.mxu0 0.0
    %585 = vmatprep.subr.mxu0 0.0
    %586 = vmatpush1.msra.mxu0 0.0
    %587 = vmatprep.mubr.f32.mxu0 0.0
    %588 = vmatmul.mubr.f32.gmra.mrb[0].mxu0 %v511
    %v589 = vpop.f32.mrb[0].mxu0
    %v590 = vadd.f32 %v522, %v589
    %v591 = vpop.f32.mrb[0].mxu0
    %592 = vmatprep.mubr.f32.mxu0 0.0
    %593 = vmatmul.mubr.f32.gmra.mrb[0].mxu0 %v512
    %v594 = vpop.f32.mrb[0].mxu0
    %v595 = vadd.f32 %v522, %v594
    %v596 = vpop.f32.mrb[0].mxu0
    %597 = vmatprep.mubr.f32.mxu0 0.0
    %598 = vmatmul.mubr.f32.gmra.mrb[0].mxu0 %v513
    %v599 = vpop.f32.mrb[0].mxu0
    %v600 = vadd.f32 %v522, %v599
    %v601 = vpop.f32.mrb[0].mxu0
    %602 = vmatprep.mubr.f32.mxu0 0.0
    %603 = vmatmul.mubr.f32.gmra.mrb[0].mxu0 %v514
    %v604 = vpop.f32.mrb[0].mxu0
    %v605 = vadd.f32 %v522, %v604
    %v606 = vpop.f32.mrb[0].mxu0
    %607 = vmatprep.mubr.f32.mxu0 0.0
    %608 = vmatmul.mubr.f32.gmra.mrb[0].mxu0 %v515
    %v609 = vpop.f32.mrb[0].mxu0
    %v610 = vadd.f32 %v522, %v609
    %v611 = vpop.f32.mrb[0].mxu0
    %612 = vmatprep.mubr.f32.mxu0 0.0
    %613 = vmatmul.mubr.f32.gmra.mrb[0].mxu0 %v516
    %v614 = vpop.f32.mrb[0].mxu0
    %v615 = vadd.f32 %v522, %v614
    %v616 = vpop.f32.mrb[0].mxu0
    %617 = vmatprep.mubr.f32.mxu0 0.0
    %618 = vmatmul.mubr.f32.gmra.mrb[0].mxu0 %v517
    %v619 = vpop.f32.mrb[0].mxu0
    %v620 = vadd.f32 %v522, %v619
    %v621 = vpop.f32.mrb[0].mxu0
    %622 = vmatprep.mubr.f32.mxu0 0.0
    %623 = vmatmul.mubr.f32.gmra.mrb[0].mxu0 %v518
    %v624 = vpop.f32.mrb[0].mxu0
    %v625 = vadd.f32 %v522, %v624
    %v626 = vpop.f32.mrb[0].mxu0
    %627 = vdwg.mxu0
    %628 = vst [vmem:[%s5] sm:$0xff] %v590
    %629 = vst [vmem:[%s5 + $0x8] sm:$0xff] %v595
    %630 = vst [vmem:[%s5 + $0x10] sm:$0xff] %v600
    %631 = vst [vmem:[%s5 + $0x18] sm:$0xff] %v605
    %632 = vst [vmem:[%s5 + $0x20] sm:$0xff] %v610
    %633 = vst [vmem:[%s5 + $0x28] sm:$0xff] %v615
    %634 = vst [vmem:[%s5 + $0x30] sm:$0xff] %v620
    %635 = vst [vmem:[%s5 + $0x38] sm:$0xff] %v625
    // Predicated region
    $region30: #{forward.1} parent=1 // pred_check
      _
    $region31: #{forward.1} parent=1 // pred_check_branch
      %637 = sbr.rel (0) target = $region33
    $region32: #{forward.1} parent=1 // pred_region
      _
    $region33: #{forward.1} parent=1 // pred_fallthru
      _
    // Predicated region
    $region34: #{forward.1} parent=1 // pred_check
      _
    $region35: #{forward.1} parent=1 // pred_check_branch
      %639 = sbr.rel (0) target = $region37
    $region36: #{forward.1} parent=1 // pred_region
      _
    $region37: #{forward.1} parent=1 // pred_fallthru
      _
    %640 = vsyncpa [#allocation4], 1
    %641 = vsyncpa [#allocation6], 1

</llo_original>
